<compile_context>
chip_gen: v5e
topology: v5e:2x2
jax: 0.10.0
libtpu: 0.0.40
codegen_flags: <defaults>
</compile_context>

<pallas_src>
import jax
import jax.numpy as jnp
from jax.experimental import pallas as pl
from jax.experimental.pallas import tpu as pltpu

LN_EPS = 1e-5


def _round_up(x, m):
    return (x + m - 1) // m * m


def _lmhead_kernel(x_ref, gamma_ref, beta_ref, w_ref, out_ref, xn_scratch):
    # Grid = (n_tiles, v_tiles).  LayerNorm for this token tile is computed once
    # (first vocab tile) and cached in bf16 VMEM scratch; the vocab axis is
    # "arbitrary" (sequential per-core), so the scratch is valid for all v tiles.
    @pl.when(pl.program_id(1) == 0)
    def _():
        x = x_ref[...].astype(jnp.float32)                      # [tn, H]
        mean = jnp.mean(x, axis=-1, keepdims=True)              # [tn, 1]
        xc = x - mean
        var = jnp.mean(xc * xc, axis=-1, keepdims=True)
        inv = jax.lax.rsqrt(var + LN_EPS)
        xn = xc * inv * gamma_ref[...].astype(jnp.float32) + beta_ref[...].astype(jnp.float32)
        xn_scratch[...] = xn.astype(xn_scratch.dtype)

    # [tn, H] x [tv, H] contracting on H  ->  [tn, tv], f32 accumulation on MXU.
    out_ref[...] = jax.lax.dot_general(
        xn_scratch[...],
        w_ref[...].astype(xn_scratch.dtype),
        dimension_numbers=(((1,), (1,)), ((), ())),
        preferred_element_type=jnp.float32,
    ).astype(out_ref.dtype)


def lm_head_forward(
    hidden_states,     # [B, S, H], any float dtype (cast to f32 inside the kernel for LN)
    ln_gamma,          # [H]
    ln_beta,           # [H]
    lm_w,              # [V, H]  (native PyTorch Linear layout / native dtype)
    *,
    tile_n=256,
    tile_v=1024,
    matmul_dtype=jnp.bfloat16,
    out_dtype=None,
):
    B, S, H = hidden_states.shape
    V, H_w = lm_w.shape
    assert H_w == H, "lm_head weight hidden dim mismatch"
    N = B * S
    if out_dtype is None:
        out_dtype = hidden_states.dtype

    # Effective tile sizes: keep TPU tiling alignment (8 sublanes / 128 lanes)
    # while clamping to the (padded) problem size for small shapes.
    tile_n_eff = min(tile_n, _round_up(N, 8))
    tile_v_eff = min(tile_v, _round_up(V, 128))
    N_pad = _round_up(N, tile_n_eff)
    V_pad = _round_up(V, tile_v_eff)

    # Flatten tokens; pad only if needed (padded rows / vocab rows are discarded).
    x2d = hidden_states.reshape(N, H)
    if N_pad != N:
        x2d = jnp.pad(x2d, ((0, N_pad - N), (0, 0)))
    w = lm_w
    if V_pad != V:
        w = jnp.pad(w, ((0, V_pad - V), (0, 0)))
    gamma2d = ln_gamma.reshape(1, H)
    beta2d = ln_beta.reshape(1, H)

    grid = (N_pad // tile_n_eff, V_pad // tile_v_eff)

    # Explicit VMEM budget: double-buffered input / weight / output tiles,
    # plus the bf16 xn scratch, plus headroom.
    x_b = jnp.dtype(x2d.dtype).itemsize
    w_b = jnp.dtype(w.dtype).itemsize
    o_b = jnp.dtype(out_dtype).itemsize
    s_b = jnp.dtype(matmul_dtype).itemsize
    vmem_bytes = (
        2 * tile_n_eff * H * x_b
        + 2 * tile_v_eff * H * w_b
        + 2 * tile_n_eff * tile_v_eff * o_b
        + tile_n_eff * H * s_b
        + 4 * H * 4  # gamma + beta
    )
    vmem_limit = max(32 * 2**20, min(int(vmem_bytes * 1.5) + (4 << 20), 64 * 2**20))

    out = pl.pallas_call(
        _lmhead_kernel,
        out_shape=jax.ShapeDtypeStruct((N_pad, V_pad), out_dtype),
        grid_spec=pltpu.PrefetchScalarGridSpec(
            num_scalar_prefetch=0,
            grid=grid,
            in_specs=[
                pl.BlockSpec((tile_n_eff, H), lambda i, j: (i, 0)),   # activations tile
                pl.BlockSpec((1, H), lambda i, j: (0, 0)),            # ln gamma
                pl.BlockSpec((1, H), lambda i, j: (0, 0)),            # ln beta
                pl.BlockSpec((tile_v_eff, H), lambda i, j: (j, 0)),   # weight tile [TV, H]
            ],
            out_specs=pl.BlockSpec((tile_n_eff, tile_v_eff), lambda i, j: (i, j)),
            scratch_shapes=[pltpu.VMEM((tile_n_eff, H), matmul_dtype)],
        ),
        compiler_params=pltpu.CompilerParams(
            dimension_semantics=("parallel", "arbitrary"),
            vmem_limit_bytes=vmem_limit,
        ),
    )(x2d, gamma2d, beta2d, w)

    return out[:N, :V].reshape(B, S, V)


def _reference(hidden_states, ln_gamma, ln_beta, lm_w, matmul_dtype=jnp.bfloat16):
    # LayerNorm in f32, matmul with the same bf16-input / f32-accumulate recipe
    # as the kernel (so the comparison is apples-to-apples).
    x = hidden_states.astype(jnp.float32)
    mean = jnp.mean(x, axis=-1, keepdims=True)
    var = jnp.mean((x - mean) ** 2, axis=-1, keepdims=True)
    xn = (x - mean) * jax.lax.rsqrt(var + LN_EPS) * ln_gamma.astype(jnp.float32) \
        + ln_beta.astype(jnp.float32)
    return jnp.einsum(
        "bsh,vh->bsv",
        xn.astype(matmul_dtype),
        lm_w.astype(matmul_dtype),
        preferred_element_type=jnp.float32,
    )


if __name__ == "__main__":
    B, S, H, V = 2, 8, 32, 256  # small synthetic shapes consistent with the module

    key = jax.random.PRNGKey(0)
    k1, k2, k3, k4 = jax.random.split(key, 4)

    hidden_states = jax.random.normal(k1, (B, S, H), dtype=jnp.float32)
    # Deterministic synthetic parameters (no checkpoint load).
    ln_gamma = 1.0 + 0.1 * jax.random.normal(k2, (H,), dtype=jnp.float32)
    ln_beta = 0.1 * jax.random.normal(k3, (H,), dtype=jnp.float32)
    lm_w = 0.02 * jax.random.normal(k4, (V, H), dtype=jnp.float32)  # [vocab, hidden]

    logits = lm_head_forward(hidden_states, ln_gamma, ln_beta, lm_w)
    logits = jax.block_until_ready(logits)

    ref = _reference(hidden_states, ln_gamma, ln_beta, lm_w)
    assert logits.shape == (B, S, V)
    assert jnp.allclose(logits.astype(jnp.float32), ref, atol=2e-3, rtol=2e-3), \
        "mismatch vs reference"

    print("KERNEL_OK")
</pallas_src>

<mosaic_0001>
module attributes {stable_mosaic.version = 11 : i64} {
  func.func @_lmhead_kernel(%arg0: i32, %arg1: i32, %arg2: memref<16x32xf32, #tpu.memory_space<vmem>>, %arg3: memref<1x32xf32, #tpu.memory_space<vmem>>, %arg4: memref<1x32xf32, #tpu.memory_space<vmem>>, %arg5: memref<256x32xf32, #tpu.memory_space<vmem>>, %arg6: memref<16x256xf32, #tpu.memory_space<vmem>>, %arg7: memref<16x32xbf16, #tpu.memory_space<vmem>>) attributes {dimension_semantics = [#tpu.dimension_semantics<parallel>, #tpu.dimension_semantics<arbitrary>], iteration_bounds = array<i64: 1, 1>, scalar_prefetch = 0 : i64, scratch_operands = 1 : i64, tpu.core_type = #tpu.core_type<tc>, window_params = [{transform_indices = @transform_0, window_bounds = array<i64: 16, 32>}, {pipeline_mode = #tpu.pipeline_mode<synchronous>, transform_indices = @transform_1, window_bounds = array<i64: 1, 32>}, {pipeline_mode = #tpu.pipeline_mode<synchronous>, transform_indices = @transform_2, window_bounds = array<i64: 1, 32>}, {transform_indices = @transform_3, window_bounds = array<i64: 256, 32>}, {transform_indices = @transform_4, window_bounds = array<i64: 16, 256>}]} {
    %c0_i32 = arith.constant 0 : i32
    %0 = arith.cmpi eq, %arg1, %c0_i32 : i32
    %1 = arith.extui %0 : i1 to i32
    %c0_i32_0 = arith.constant 0 : i32
    %2 = arith.cmpi ne, %1, %c0_i32_0 : i32
    scf.if %2 {
      %c0_6 = arith.constant 0 : index
      %c0_7 = arith.constant 0 : index
      %8 = vector.load %arg2[%c0_6, %c0_7] : memref<16x32xf32, #tpu.memory_space<vmem>>, vector<16x32xf32>
      %cst_8 = arith.constant dense<0.000000e+00> : vector<16xf32>
      %9 = vector.multi_reduction <add>, %8, %cst_8 [1] : vector<16x32xf32> to vector<16xf32>
      %10 = vector.shape_cast %9 : vector<16xf32> to vector<16x1xf32>
      %cst_9 = arith.constant 3.200000e+01 : f32
      %11 = vector.broadcast %cst_9 : f32 to vector<16x1xf32>
      %12 = arith.divf %10, %11 : vector<16x1xf32>
      %13 = vector.broadcast %12 : vector<16x1xf32> to vector<16x32xf32>
      %14 = arith.subf %8, %13 : vector<16x32xf32>
      %15 = arith.mulf %14, %14 : vector<16x32xf32>
      %cst_10 = arith.constant dense<0.000000e+00> : vector<16xf32>
      %16 = vector.multi_reduction <add>, %15, %cst_10 [1] : vector<16x32xf32> to vector<16xf32>
      %17 = vector.shape_cast %16 : vector<16xf32> to vector<16x1xf32>
      %cst_11 = arith.constant 3.200000e+01 : f32
      %18 = vector.broadcast %cst_11 : f32 to vector<16x1xf32>
      %19 = arith.divf %17, %18 : vector<16x1xf32>
      %cst_12 = arith.constant 9.99999974E-6 : f32
      %20 = vector.broadcast %cst_12 : f32 to vector<16x1xf32>
      %21 = arith.addf %19, %20 : vector<16x1xf32>
      %22 = math.rsqrt %21 : vector<16x1xf32>
      %23 = vector.broadcast %22 : vector<16x1xf32> to vector<16x32xf32>
      %24 = arith.mulf %14, %23 : vector<16x32xf32>
      %c0_13 = arith.constant 0 : index
      %c0_14 = arith.constant 0 : index
      %25 = vector.load %arg3[%c0_13, %c0_14] : memref<1x32xf32, #tpu.memory_space<vmem>>, vector<1x32xf32>
      %26 = vector.broadcast %25 : vector<1x32xf32> to vector<16x32xf32>
      %27 = arith.mulf %24, %26 : vector<16x32xf32>
      %c0_15 = arith.constant 0 : index
      %c0_16 = arith.constant 0 : index
      %28 = vector.load %arg4[%c0_15, %c0_16] : memref<1x32xf32, #tpu.memory_space<vmem>>, vector<1x32xf32>
      %29 = vector.broadcast %28 : vector<1x32xf32> to vector<16x32xf32>
      %30 = arith.addf %27, %29 : vector<16x32xf32>
      %31 = arith.truncf %30 : vector<16x32xf32> to vector<16x32xbf16>
      %c0_17 = arith.constant 0 : index
      %c0_18 = arith.constant 0 : index
      %32 = vector.load %arg7[%c0_17, %c0_18] : memref<16x32xbf16, #tpu.memory_space<vmem>>, vector<16x32xbf16>
      tpu.vector_store %arg7[%c0_17, %c0_18], %31 {strides = array<i32>} : memref<16x32xbf16, #tpu.memory_space<vmem>>, vector<16x32xbf16>,
    } else {
    }
    %c0 = arith.constant 0 : index
    %c0_1 = arith.constant 0 : index
    %3 = vector.load %arg7[%c0, %c0_1] : memref<16x32xbf16, #tpu.memory_space<vmem>>, vector<16x32xbf16>
    %c0_2 = arith.constant 0 : index
    %c0_3 = arith.constant 0 : index
    %4 = vector.load %arg5[%c0_2, %c0_3] : memref<256x32xf32, #tpu.memory_space<vmem>>, vector<256x32xf32>
    %5 = arith.truncf %4 : vector<256x32xf32> to vector<256x32xbf16>
    %cst = arith.constant dense<0.000000e+00> : vector<16x256xf32>
    %6 = tpu.matmul %3, %5, %cst {dimension_numbers = #tpu.dot_dimension_numbers<[1], [1], [0], [0], [0, 0, 1, 0], [], []>} : vector<16x32xbf16>, vector<256x32xbf16>, vector<16x256xf32> -> vector<16x256xf32>
    %c0_4 = arith.constant 0 : index
    %c0_5 = arith.constant 0 : index
    %7 = vector.load %arg6[%c0_4, %c0_5] : memref<16x256xf32, #tpu.memory_space<vmem>>, vector<16x256xf32>
    tpu.vector_store %arg6[%c0_4, %c0_5], %6 {strides = array<i32>} : memref<16x256xf32, #tpu.memory_space<vmem>>, vector<16x256xf32>,
    return
  }
  func.func @transform_0(%arg0: i32, %arg1: i32) -> (i32, i32) {
    %c0_i32 = arith.constant 0 : i32
    %c0_i32_0 = arith.constant 0 : i32
    return %arg0, %c0_i32 : i32, i32
  }
  func.func @transform_1(%arg0: i32, %arg1: i32) -> (i32, i32) {
    %c0_i32 = arith.constant 0 : i32
    %c0_i32_0 = arith.constant 0 : i32
    %c0_i32_1 = arith.constant 0 : i32
    return %c0_i32, %c0_i32_0 : i32, i32
  }
  func.func @transform_2(%arg0: i32, %arg1: i32) -> (i32, i32) {
    %c0_i32 = arith.constant 0 : i32
    %c0_i32_0 = arith.constant 0 : i32
    %c0_i32_1 = arith.constant 0 : i32
    return %c0_i32, %c0_i32_0 : i32, i32
  }
  func.func @transform_3(%arg0: i32, %arg1: i32) -> (i32, i32) {
    %c0_i32 = arith.constant 0 : i32
    %c0_i32_0 = arith.constant 0 : i32
    return %arg1, %c0_i32 : i32, i32
  }
  func.func @transform_4(%arg0: i32, %arg1: i32) -> (i32, i32) {
    %c0_i32 = arith.constant 0 : i32
    return %arg0, %arg1 : i32, i32
  }
}

</mosaic_0001>

<llo_original>
// kernel: tpu_custom_call.1
$region0: #{tpu_custom_call.1}
  #allocation0 [shape = 'u32[]', space=smem, size = 0x4, offset = 0x4, fixed_abs, tag = 'smem constant byte address 0x4 - core index']
  #allocation1 [shape = 'u32[72,128]{1,0:T(1,128)}', space=vmem, size = 0x9000, scoped, tag = 'internal scratch']
  #allocation2 [shape = 'bf16[16,32]{1,0:T(8,128)(2,1)}', space=vmem, size = 0x1000, scoped, tag = 'scratch operand']
  %s0 = inlined_call_operand.vmem [shape: f32[16,32], index: 0, kind: input, shape index: {}]
  %s1 = inlined_call_operand.vmem [shape: f32[1,32], index: 1, kind: input, shape index: {}]
  %s2 = inlined_call_operand.vmem [shape: f32[1,32], index: 2, kind: input, shape index: {}]
  %s3 = inlined_call_operand.vmem [shape: f32[256,32], index: 3, kind: input, shape index: {}]
  %s4 = inlined_call_operand.hbm [shape: f32[16,256], index: 4, kind: output, shape index: {}]
  %s5 = sld [smem:[#allocation0]]
  $region30: #{tpu_custom_call.1} parent=0
    _
  %s7 = ssub.s32 1, %s5
  %s8 = scalar_select 0, %s7, %s5
  $region1: #{tpu_custom_call.1} parent=0
    #allocation3 [shape = 'u8[16384]{0}', space=vmem, size = 0x4000, scoped, tag = 'output window, operand 0, single buffered']
    #allocation4 [shape = 's32[1]{0}', space=sflag, size = 0x4, scoped, tag = 'scoped memory for tpu_custom_call.1']
    %9 = vsyncpa [#allocation4], 0
    // Predicated region
    $region2: #{tpu_custom_call.1} parent=1 // pred_check
      _
    $region3: #{tpu_custom_call.1} parent=1 // pred_check_branch
      %11 = sbr.rel (0) target = $region5
    $region4: #{tpu_custom_call.1} parent=1 // pred_region
      _
    $region5: #{tpu_custom_call.1} parent=1 // pred_fallthru
      _
    // Predicated region
    $region6: #{tpu_custom_call.1} parent=1 // pred_check
      _
    $region7: #{tpu_custom_call.1} parent=1 // pred_check_branch
      %13 = sbr.rel (0) target = $region9
    $region8: #{tpu_custom_call.1} parent=1 // pred_region
      _
    $region9: #{tpu_custom_call.1} parent=1 // pred_fallthru
      _
    // Predicated region
    $region10: #{tpu_custom_call.1} parent=1 // pred_check
      _
    $region11: #{tpu_custom_call.1} parent=1 // pred_check_branch
      %15 = sbr.rel (0) target = $region13
    $region12: #{tpu_custom_call.1} parent=1 // pred_region
      _
    $region13: #{tpu_custom_call.1} parent=1 // pred_fallthru
      _
    // Predicated region
    $region14: #{tpu_custom_call.1} parent=1 // pred_check
      _
    $region15: #{tpu_custom_call.1} parent=1 // pred_check_branch
      %17 = sbr.rel (0) target = $region17
    $region16: #{tpu_custom_call.1} parent=1 // pred_region
      _
    $region17: #{tpu_custom_call.1} parent=1 // pred_fallthru
      _
    %p18 = scmp.eq.s32.totalorder 0, 0
    // Predicated region
    $region18: #{tpu_custom_call.1} parent=1 // pred_check
      %p19 = pneg %p18
    $region19: #{tpu_custom_call.1} parent=1 // pred_check_branch
      %21 = sbr.rel (%p19) target = $region21
    $region20: #{tpu_custom_call.1} parent=1 // pred_region
      %v22 = vld [vmem:[%s0] sm:$0xff]
      %v23 = vld [vmem:[%s0 + $0x8] sm:$0xff]
      %vm24 = vcmask 261120
      %v25 = vsel %vm24, %v22, 0.0
      %26 = vadd.xlane.f32.xlu0 %v25
      %v27 = vpop.xlane.xlu0 %26
      %v28 = vsel %vm24, %v23, 0.0
      %29 = vadd.xlane.f32.xlu0 %v28
      %v30 = vpop.xlane.xlu0 %29
      %v31 = vrcp.pop 32.0
      %v32 = vmul.f32 32.0, %v31
      %v33 = vsub.f32 1.0, %v32
      %v34 = vmul.f32 %v31, %v33
      %v35 = vadd.f32 %v31, %v34
      %vm36 = vweird.f32 %v31
      %v37 = vsel %vm36, %v31, %v35
      %v38 = vmul.f32 %v27, %v37
      %v39 = vmul.f32 %v30, %v37
      %v40 = vsub.f32 %v22, %v38
      %v41 = vsub.f32 %v23, %v39
      %v42 = vmul.f32 %v40, %v40
      %v43 = vmul.f32 %v41, %v41
      %v44 = vsel %vm24, %v42, 0.0
      %45 = vadd.xlane.f32.xlu0 %v44
      %v46 = vpop.xlane.xlu0 %45
      %v47 = vsel %vm24, %v43, 0.0
      %48 = vadd.xlane.f32.xlu0 %v47
      %v49 = vpop.xlane.xlu0 %48
      %v50 = vmul.f32 %v46, %v37
      %v51 = vmul.f32 %v49, %v37
      %v52 = vadd.f32 %v50, 1e-05
      %v53 = vadd.f32 %v51, 1e-05
      %v54 = vrsqrt.pop %v52
      %v55 = vmul.f32 %v54, %v52
      %v56 = vmul.f32 %v55, %v54
      %v57 = vmul.f32 0.5, %v56
      %v58 = vsub.f32 1.5, %v57
      %v59 = vmul.f32 %v54, %v58
      %vm60 = vweird.f32 %v52
      %vm61 = vweird.f32 %v54
      %vm62 = vmor %vm60, %vm61
      %v63 = vsel %vm62, %v54, %v59
      %v64 = vrsqrt.pop %v53
      %v65 = vmul.f32 %v64, %v53
      %v66 = vmul.f32 %v65, %v64
      %v67 = vmul.f32 0.5, %v66
      %v68 = vsub.f32 1.5, %v67
      %v69 = vmul.f32 %v64, %v68
      %vm70 = vweird.f32 %v53
      %vm71 = vweird.f32 %v64
      %vm72 = vmor %vm70, %vm71
      %v73 = vsel %vm72, %v64, %v69
      %v74 = vmul.f32 %v40, %v63
      %v75 = vmul.f32 %v41, %v73
      %v76 = vld [vmem:[%s1] sm:$0x1]
      %v78 = vperm.slane %v76, 0
      %v80 = vmul.f32 %v74, %v78
      %v81 = vmul.f32 %v75, %v78
      %v82 = vld [vmem:[%s2] sm:$0x1]
      %v84 = vperm.slane %v82, 0
      %v86 = vadd.f32 %v80, %v84
      %v87 = vadd.f32 %v81, %v84
      %v88 = vpack.c.bf16 %v86, %v86
      %v89 = vpack.c.bf16 %v87, %v87
      %vm90 = vcmask 257024
      %91 = vst.msk [vmem:[#allocation2] sm:$0xf] %vm90, %v88
      %92 = vst.msk [vmem:[#allocation2 + $0x4] sm:$0xf] %vm90, %v89
    $region21: #{tpu_custom_call.1} parent=1 // pred_fallthru
      _
    %v93 = vld [vmem:[#allocation2] sm:$0xf]
    %v94 = vld [vmem:[#allocation2 + $0x4] sm:$0xf]
    %v95 = vld [vmem:[%s3] sm:$0xff]
    %v96 = vld [vmem:[%s3 + $0x8] sm:$0xff]
    %v97 = vld [vmem:[%s3 + $0x10] sm:$0xff]
    %v98 = vld [vmem:[%s3 + $0x18] sm:$0xff]
    %v99 = vld [vmem:[%s3 + $0x20] sm:$0xff]
    %v100 = vld [vmem:[%s3 + $0x28] sm:$0xff]
    %v101 = vld [vmem:[%s3 + $0x30] sm:$0xff]
    %v102 = vld [vmem:[%s3 + $0x38] sm:$0xff]
    %v103 = vld [vmem:[%s3 + $0x40] sm:$0xff]
    %v104 = vld [vmem:[%s3 + $0x48] sm:$0xff]
    %v105 = vld [vmem:[%s3 + $0x50] sm:$0xff]
    %v106 = vld [vmem:[%s3 + $0x58] sm:$0xff]
    %v107 = vld [vmem:[%s3 + $0x60] sm:$0xff]
    %v108 = vld [vmem:[%s3 + $0x68] sm:$0xff]
    %v109 = vld [vmem:[%s3 + $0x70] sm:$0xff]
    %v110 = vld [vmem:[%s3 + $0x78] sm:$0xff]
    %v111 = vld [vmem:[%s3 + $0x80] sm:$0xff]
    %v112 = vld [vmem:[%s3 + $0x88] sm:$0xff]
    %v113 = vld [vmem:[%s3 + $0x90] sm:$0xff]
    %v114 = vld [vmem:[%s3 + $0x98] sm:$0xff]
    %v115 = vld [vmem:[%s3 + $0xa0] sm:$0xff]
    %v116 = vld [vmem:[%s3 + $0xa8] sm:$0xff]
    %v117 = vld [vmem:[%s3 + $0xb0] sm:$0xff]
    %v118 = vld [vmem:[%s3 + $0xb8] sm:$0xff]
    %v119 = vld [vmem:[%s3 + $0xc0] sm:$0xff]
    %v120 = vld [vmem:[%s3 + $0xc8] sm:$0xff]
    %v121 = vld [vmem:[%s3 + $0xd0] sm:$0xff]
    %v122 = vld [vmem:[%s3 + $0xd8] sm:$0xff]
    %v123 = vld [vmem:[%s3 + $0xe0] sm:$0xff]
    %v124 = vld [vmem:[%s3 + $0xe8] sm:$0xff]
    %v125 = vld [vmem:[%s3 + $0xf0] sm:$0xff]
    %v126 = vld [vmem:[%s3 + $0xf8] sm:$0xff]
    %v127 = vpack.c.bf16 %v96, %v95
    %v128 = vpack.c.bf16 %v98, %v97
    %v129 = vpack.c.bf16 %v100, %v99
    %v130 = vpack.c.bf16 %v102, %v101
    %v131 = vpack.c.bf16 %v104, %v103
    %v132 = vpack.c.bf16 %v106, %v105
    %v133 = vpack.c.bf16 %v108, %v107
    %v134 = vpack.c.bf16 %v110, %v109
    %v135 = vpack.c.bf16 %v112, %v111
    %v136 = vpack.c.bf16 %v114, %v113
    %v137 = vpack.c.bf16 %v116, %v115
    %v138 = vpack.c.bf16 %v118, %v117
    %v139 = vpack.c.bf16 %v120, %v119
    %v140 = vpack.c.bf16 %v122, %v121
    %v141 = vpack.c.bf16 %v124, %v123
    %v142 = vpack.c.bf16 %v126, %v125
    %v145 = vunpack.c.l.b16 %v93
    %v146 = vunpack.c.l.b16 %v94
    %v147 = vpack.c.b16 %v146, %v145
    %vm148 = vcmask 261120
    %v150 = vsel %vm148, %v147, 0
    %v153 = vsel %vm148, %v127, 0
    %v156 = vsel %vm148, %v128, 0
    %v159 = vsel %vm148, %v129, 0
    %v162 = vsel %vm148, %v130, 0
    %v165 = vsel %vm148, %v131, 0
    %v168 = vsel %vm148, %v132, 0
    %v171 = vsel %vm148, %v133, 0
    %v174 = vsel %vm148, %v134, 0
    %v177 = vsel %vm148, %v135, 0
    %v180 = vsel %vm148, %v136, 0
    %v183 = vsel %vm148, %v137, 0
    %v186 = vsel %vm148, %v138, 0
    %v189 = vsel %vm148, %v139, 0
    %v192 = vsel %vm148, %v140, 0
    %v195 = vsel %vm148, %v141, 0
    %v198 = vsel %vm148, %v142, 0
    %200 = vmatpush.bf16.xpose.msra.mxu0 %v174
    %201 = vmatpush.bf16.xpose.msra.mxu0 %v171
    %202 = vmatpush.bf16.xpose.msra.mxu0 %v168
    %203 = vmatpush.bf16.xpose.msra.mxu0 %v165
    %204 = vmatpush.bf16.xpose.msra.mxu0 %v162
    %205 = vmatpush.bf16.xpose.msra.mxu0 %v159
    %206 = vmatpush.bf16.xpose.msra.mxu0 %v156
    %207 = vmatpush.bf16.xpose.msra.mxu0 %v153
    %208 = vmatmul.bf16.gmra.mxu0 %v150
    %v209 = vpop.f32.mrf.mxu0
    %v210 = vadd.f32 0.0, %v209
    %v211 = vpop.f32.mrf.mxu0
    %v212 = vadd.f32 0.0, %v211
    %213 = vdwg.mxu0
    %214 = vmatpush.bf16.xpose.msra.mxu0 %v198
    %215 = vmatpush.bf16.xpose.msra.mxu0 %v195
    %216 = vmatpush.bf16.xpose.msra.mxu0 %v192
    %217 = vmatpush.bf16.xpose.msra.mxu0 %v189
    %218 = vmatpush.bf16.xpose.msra.mxu0 %v186
    %219 = vmatpush.bf16.xpose.msra.mxu0 %v183
    %220 = vmatpush.bf16.xpose.msra.mxu0 %v180
    %221 = vmatpush.bf16.xpose.msra.mxu0 %v177
    %222 = vmatmul.bf16.gmra.mxu0 %v150
    %v223 = vpop.f32.mrf.mxu0
    %v224 = vadd.f32 0.0, %v223
    %v225 = vpop.f32.mrf.mxu0
    %v226 = vadd.f32 0.0, %v225
    %227 = vdwg.mxu0
    %228 = vst [vmem:[#allocation3] sm:$0xff] %v210
    %229 = vst [vmem:[#allocation3 + $0x8] sm:$0xff] %v224
    %230 = vst [vmem:[#allocation3 + $0x10] sm:$0xff] %v212
    %231 = vst [vmem:[#allocation3 + $0x18] sm:$0xff] %v226
    // Predicated region
    $region22: #{tpu_custom_call.1} parent=1 // pred_check
      _
    $region23: #{tpu_custom_call.1} parent=1 // pred_check_branch
      %233 = sbr.rel (0) target = $region25
    $region24: #{tpu_custom_call.1} parent=1 // pred_region
      %235 = vsyncadd [#allocation4], 0
      %s236 = sshll.u32 [#allocation3], 4
      %s237 = int_to_ptr.vmem [resolvable:$true] %s236
      %s238 = sshll.u32 %s4, 4
      %s239 = int_to_ptr.hbm [resolvable:$true] %s238
      %244 = dma.vmem_to_hbm [thread:$0]  %s237, 512, %s239, [#allocation4], 256, 256, 16
    $region25: #{tpu_custom_call.1} parent=1 // pred_fallthru
      _
    // Predicated region
    $region26: #{tpu_custom_call.1} parent=1 // pred_check
      _
    $region27: #{tpu_custom_call.1} parent=1 // pred_check_branch
      %246 = sbr.rel (0) target = $region29
    $region28: #{tpu_custom_call.1} parent=1 // pred_region
      %248 = dma.done [#allocation4], 512
    $region29: #{tpu_custom_call.1} parent=1 // pred_fallthru
      _
    %249 = vsyncpa [#allocation4], 1

</llo_original>
